<compile_context>
chip_gen: v5e
topology: v5e:2x2
jax: 0.10.0
libtpu: 0.0.40
codegen_flags: <defaults>
</compile_context>

<pallas_src>
import functools

import jax
import jax.numpy as jnp
from jax.experimental import pallas as pl
from jax.experimental.pallas import tpu as pltpu


def _round_up(x: int, m: int) -> int:
    return ((x + m - 1) // m) * m


def _embedding_kernel(idx_ref, w_ref, o_ref, acc_ref):
    # idx_ref: (Tb, 1)  int32   token ids for this token block
    # w_ref  : (Vb, D)          vocab slice of the (zero-padded) table
    # o_ref  : (Tb, D)          gathered embeddings for this token block
    # acc_ref: (Tb, D)  f32     accumulator across vocab blocks
    v_blk = pl.program_id(1)
    n_vblk = pl.num_programs(1)
    tb = idx_ref.shape[0]
    vb = w_ref.shape[0]

    @pl.when(v_blk == 0)
    def _():
        acc_ref[...] = jnp.zeros_like(acc_ref)

    ids = idx_ref[...]                                               # (Tb, 1)
    vocab_ids = v_blk * vb + jax.lax.broadcasted_iota(jnp.int32, (tb, vb), 1)
    onehot = (vocab_ids == ids).astype(w_ref.dtype)                  # (Tb, Vb)
    # Single MXU matmul per (token block, vocab block); f32 accumulation.
    acc_ref[...] += jnp.dot(onehot, w_ref[...],
                            preferred_element_type=jnp.float32)

    @pl.when(v_blk == n_vblk - 1)
    def _():
        o_ref[...] = acc_ref[...].astype(o_ref.dtype)


@functools.partial(jax.jit, static_argnames=("block_tokens", "block_vocab"))
def embedding_lookup(indices: jnp.ndarray, weight: jnp.ndarray,
                     *, block_tokens: int | None = None,
                     block_vocab: int | None = None) -> jnp.ndarray:
    """Equivalent of `nn.Embedding(num_embeddings, embedding_dim)(indices)`.

    indices: integer array of any shape (...,)
    weight : (num_embeddings, embedding_dim)
    returns: (..., embedding_dim) in weight.dtype
    """
    num_emb, dim = weight.shape
    lead_shape = indices.shape
    flat = indices.reshape(-1).astype(jnp.int32)
    num_tok = flat.shape[0]
    itemsize = weight.dtype.itemsize

    # Token block: large for grid/lane efficiency, bounded by a ~4 MiB f32
    # accumulator / output block (keeps total VMEM well under the scoped
    # limit on all of v5e / v6e / v7x).
    if block_tokens is None:
        tb = min(256, _round_up(num_tok, 8),
                 max(8, ((4 << 20) // (dim * 4)) // 8 * 8))
    else:
        tb = max(8, _round_up(block_tokens, 8))
    tok_pad = _round_up(num_tok, tb)

    # Vocab block: bounded so the weight tile and the (Tb, Vb) one-hot tile
    # stay small in VMEM even when double-buffered.
    if block_vocab is None:
        vb = min(_round_up(num_emb, 8), 2048,
                 max(8, ((4 << 20) // (dim * itemsize)) // 8 * 8))
    else:
        vb = max(8, _round_up(block_vocab, 8))
    voc_pad = _round_up(num_emb, vb)

    # Explicit zero padding (padded vocab rows never match a valid id;
    # padded tokens look up row 0 and are sliced off below).
    idx2d = jnp.pad(flat, (0, tok_pad - num_tok)).reshape(tok_pad, 1)
    w_pad = jnp.pad(weight, ((0, voc_pad - num_emb), (0, 0)))

    grid = (tok_pad // tb, voc_pad // vb)

    out = pl.pallas_call(
        _embedding_kernel,
        out_shape=jax.ShapeDtypeStruct((tok_pad, dim), weight.dtype),
        grid=grid,
        in_specs=[
            pl.BlockSpec((tb, 1), lambda t, v: (t, 0)),
            pl.BlockSpec((vb, dim), lambda t, v: (v, 0)),
        ],
        out_specs=pl.BlockSpec((tb, dim), lambda t, v: (t, 0)),
        scratch_shapes=[pltpu.VMEM((tb, dim), jnp.float32)],
        compiler_params=pltpu.CompilerParams(
            dimension_semantics=("parallel", "arbitrary"),
            vmem_limit_bytes=32 * 1024 * 1024,
        ),
    )(idx2d, w_pad)

    return out[:num_tok].reshape(*lead_shape, dim)


if __name__ == "__main__":
    key = jax.random.PRNGKey(0)
    k_w, k_x, k_w2, k_x2 = jax.random.split(key, 4)

    # Small shapes consistent with the module: batch=2, seq=8,
    # num_embeddings=64, embedding_dim=128 (lane-aligned embedding dim).
    num_embeddings, embedding_dim = 64, 128
    batch, seq = 2, 8
    weight = jax.random.normal(k_w, (num_embeddings, embedding_dim),
                               dtype=jnp.float32)
    x = jax.random.randint(k_x, (batch, seq), 0, num_embeddings,
                           dtype=jnp.int32)

    out = embedding_lookup(x, weight)
    out = jax.block_until_ready(out)
    ref = jnp.take(weight, x, axis=0)
    assert out.shape == (batch, seq, embedding_dim), out.shape
    assert jnp.allclose(out, ref, atol=1e-6, rtol=1e-6), "mismatch vs reference"

    # Second check: non-divisible token count / vocab, small embedding dim,
    # forced multi-block grid (exercises padding + vocab-block accumulator).
    weight2 = jax.random.normal(k_w2, (50, 32), dtype=jnp.float32)
    x2 = jax.random.randint(k_x2, (3, 5), 0, 50, dtype=jnp.int32)
    out2 = embedding_lookup(x2, weight2, block_tokens=8, block_vocab=16)
    out2 = jax.block_until_ready(out2)
    ref2 = jnp.take(weight2, x2, axis=0)
    assert out2.shape == (3, 5, 32), out2.shape
    assert jnp.allclose(out2, ref2, atol=1e-6, rtol=1e-6), "mismatch (padded case)"

    print("KERNEL_OK")
</pallas_src>

<mosaic_0001>
module attributes {stable_mosaic.version = 11 : i64} {
  func.func @_embedding_kernel(%arg0: i32, %arg1: i32, %arg2: memref<16x1xi32, #tpu.memory_space<vmem>>, %arg3: memref<64x128xf32, #tpu.memory_space<vmem>>, %arg4: memref<16x128xf32, #tpu.memory_space<vmem>>, %arg5: memref<16x128xf32, #tpu.memory_space<vmem>>) attributes {dimension_semantics = [#tpu.dimension_semantics<parallel>, #tpu.dimension_semantics<arbitrary>], iteration_bounds = array<i64: 1, 1>, scalar_prefetch = 0 : i64, scratch_operands = 1 : i64, tpu.core_type = #tpu.core_type<tc>, window_params = [{transform_indices = @transform_0, window_bounds = array<i64: 16, 1>}, {transform_indices = @transform_1, window_bounds = array<i64: 64, 128>}, {transform_indices = @transform_2, window_bounds = array<i64: 16, 128>}]} {
    %c0_i32 = arith.constant 0 : i32
    %0 = arith.cmpi eq, %arg1, %c0_i32 : i32
    %1 = arith.extui %0 : i1 to i32
    %c0_i32_0 = arith.constant 0 : i32
    %2 = arith.cmpi ne, %1, %c0_i32_0 : i32
    scf.if %2 {
      %cst_10 = arith.constant 0.000000e+00 : f32
      %20 = vector.broadcast %cst_10 : f32 to vector<16x128xf32>
      %c0_11 = arith.constant 0 : index
      %c0_12 = arith.constant 0 : index
      %21 = vector.load %arg5[%c0_11, %c0_12] : memref<16x128xf32, #tpu.memory_space<vmem>>, vector<16x128xf32>
      tpu.vector_store %arg5[%c0_11, %c0_12], %20 {strides = array<i32>} : memref<16x128xf32, #tpu.memory_space<vmem>>, vector<16x128xf32>,
    } else {
    }
    %c0 = arith.constant 0 : index
    %c0_1 = arith.constant 0 : index
    %3 = vector.load %arg2[%c0, %c0_1] : memref<16x1xi32, #tpu.memory_space<vmem>>, vector<16x1xi32>
    %c64_i32 = arith.constant 64 : i32
    %4 = arith.muli %arg1, %c64_i32 : i32
    %5 = tpu.iota {dimensions = array<i32: 1>} : vector<16x64xi32>
    %6 = vector.broadcast %4 : i32 to vector<16x64xi32>
    %7 = arith.addi %6, %5 : vector<16x64xi32>
    %8 = vector.broadcast %3 : vector<16x1xi32> to vector<16x64xi32>
    %9 = arith.cmpi eq, %7, %8 : vector<16x64xi32>
    %10 = arith.extui %9 : vector<16x64xi1> to vector<16x64xi32>
    %11 = arith.sitofp %10 : vector<16x64xi32> to vector<16x64xf32>
    %c0_2 = arith.constant 0 : index
    %c0_3 = arith.constant 0 : index
    %12 = vector.load %arg5[%c0_2, %c0_3] : memref<16x128xf32, #tpu.memory_space<vmem>>, vector<16x128xf32>
    %c0_4 = arith.constant 0 : index
    %c0_5 = arith.constant 0 : index
    %13 = vector.load %arg3[%c0_4, %c0_5] : memref<64x128xf32, #tpu.memory_space<vmem>>, vector<64x128xf32>
    %cst = arith.constant dense<0.000000e+00> : vector<16x128xf32>
    %14 = tpu.matmul %11, %13, %cst {dimension_numbers = #tpu.dot_dimension_numbers<[1], [0], [0], [1], [0, 0, 1, 1], [], []>} : vector<16x64xf32>, vector<64x128xf32>, vector<16x128xf32> -> vector<16x128xf32>
    %15 = arith.addf %12, %14 : vector<16x128xf32>
    %c0_6 = arith.constant 0 : index
    %c0_7 = arith.constant 0 : index
    %16 = vector.load %arg5[%c0_6, %c0_7] : memref<16x128xf32, #tpu.memory_space<vmem>>, vector<16x128xf32>
    tpu.vector_store %arg5[%c0_6, %c0_7], %15 {strides = array<i32>} : memref<16x128xf32, #tpu.memory_space<vmem>>, vector<16x128xf32>,
    %c0_i32_8 = arith.constant 0 : i32
    %17 = arith.cmpi eq, %arg1, %c0_i32_8 : i32
    %18 = arith.extui %17 : i1 to i32
    %c0_i32_9 = arith.constant 0 : i32
    %19 = arith.cmpi ne, %18, %c0_i32_9 : i32
    scf.if %19 {
      %c0_10 = arith.constant 0 : index
      %c0_11 = arith.constant 0 : index
      %20 = vector.load %arg5[%c0_10, %c0_11] : memref<16x128xf32, #tpu.memory_space<vmem>>, vector<16x128xf32>
      %c0_12 = arith.constant 0 : index
      %c0_13 = arith.constant 0 : index
      %21 = vector.load %arg4[%c0_12, %c0_13] : memref<16x128xf32, #tpu.memory_space<vmem>>, vector<16x128xf32>
      tpu.vector_store %arg4[%c0_12, %c0_13], %20 {strides = array<i32>} : memref<16x128xf32, #tpu.memory_space<vmem>>, vector<16x128xf32>,
    } else {
    }
    return
  }
  func.func @transform_0(%arg0: i32, %arg1: i32) -> (i32, i32) {
    %c0_i32 = arith.constant 0 : i32
    %c0_i32_0 = arith.constant 0 : i32
    return %arg0, %c0_i32 : i32, i32
  }
  func.func @transform_1(%arg0: i32, %arg1: i32) -> (i32, i32) {
    %c0_i32 = arith.constant 0 : i32
    %c0_i32_0 = arith.constant 0 : i32
    return %arg1, %c0_i32 : i32, i32
  }
  func.func @transform_2(%arg0: i32, %arg1: i32) -> (i32, i32) {
    %c0_i32 = arith.constant 0 : i32
    %c0_i32_0 = arith.constant 0 : i32
    return %arg0, %c0_i32 : i32, i32
  }
}

</mosaic_0001>

<llo_original>
// kernel: embedding_lookup.1
$region0: #{embedding_lookup.1}
  #allocation0 [shape = 'u32[]', space=smem, size = 0x4, offset = 0x4, fixed_abs, tag = 'smem constant byte address 0x4 - core index']
  #allocation1 [shape = 'u32[72,128]{1,0:T(1,128)}', space=vmem, size = 0x9000, scoped, tag = 'internal scratch']
  #allocation2 [shape = 'f32[16,128]{1,0:T(8,128)}', space=vmem, size = 0x2000, scoped, tag = 'scratch operand']
  %s0 = inlined_call_operand.vmem [shape: s32[16,1], index: 0, kind: input, shape index: {}]
  %s1 = inlined_call_operand.hbm [shape: f32[64,128], index: 1, kind: input, shape index: {}]
  %s2 = inlined_call_operand.hbm [shape: f32[16,128], index: 2, kind: output, shape index: {}]
  %s3 = sld [smem:[#allocation0]]
  $region30: #{embedding_lookup.1} parent=0
    _
  %s5 = ssub.s32 1, %s3
  %s6 = scalar_select 0, %s5, %s3
  $region1: #{embedding_lookup.1} parent=0
    #allocation3 [shape = 'u8[32768]{0}', space=vmem, size = 0x8000, scoped, tag = 'input window, operand 1, single buffered']
    #allocation4 [shape = 's32[1]{0}', space=sflag, size = 0x4, scoped, tag = 'scoped memory for embedding_lookup.1']
    #allocation5 [shape = 's32[1]{0}', space=sflag, size = 0x4, scoped, tag = 'scoped memory for embedding_lookup.1']
    #allocation6 [shape = 'u8[8192]{0}', space=vmem, size = 0x2000, scoped, tag = 'output window, operand 0, single buffered']
    %7 = vsyncpa [#allocation4], 0
    %8 = vsyncpa [#allocation5], 0
    // Predicated region
    $region2: #{embedding_lookup.1} parent=1 // pred_check
      _
    $region3: #{embedding_lookup.1} parent=1 // pred_check_branch
      %10 = sbr.rel (0) target = $region5
    $region4: #{embedding_lookup.1} parent=1 // pred_region
      _
    $region5: #{embedding_lookup.1} parent=1 // pred_fallthru
      _
    // Predicated region
    $region6: #{embedding_lookup.1} parent=1 // pred_check
      _
    $region7: #{embedding_lookup.1} parent=1 // pred_check_branch
      %12 = sbr.rel (0) target = $region9
    $region8: #{embedding_lookup.1} parent=1 // pred_region
      %14 = vsyncadd [#allocation4], 0
      %s15 = sshll.u32 %s1, 4
      %s16 = int_to_ptr.hbm [resolvable:$true] %s15
      %s17 = sshll.u32 [#allocation3], 4
      %s18 = int_to_ptr.vmem [resolvable:$true] %s17
      %23 = dma.hbm_to_vmem [thread:$0]  %s16, 1024, %s18, [#allocation4], 128, 128, 8
    $region9: #{embedding_lookup.1} parent=1 // pred_fallthru
      _
    // Predicated region
    $region10: #{embedding_lookup.1} parent=1 // pred_check
      _
    $region11: #{embedding_lookup.1} parent=1 // pred_check_branch
      %25 = sbr.rel (0) target = $region13
    $region12: #{embedding_lookup.1} parent=1 // pred_region
      %27 = dma.done [#allocation4], 1024
    $region13: #{embedding_lookup.1} parent=1 // pred_fallthru
      _
    %p28 = scmp.eq.s32.totalorder 0, 0
    // Predicated region
    $region14: #{embedding_lookup.1} parent=1 // pred_check
      %p29 = pneg %p28
    $region15: #{embedding_lookup.1} parent=1 // pred_check_branch
      %31 = sbr.rel (%p29) target = $region17
    $region16: #{embedding_lookup.1} parent=1 // pred_region
      %32 = vst [vmem:[#allocation2] sm:$0xff] 0.0
      %33 = vst [vmem:[#allocation2 + $0x8] sm:$0xff] 0.0
    $region17: #{embedding_lookup.1} parent=1 // pred_fallthru
      _
    %v34 = vld [vmem:[%s0] sm:$0xff]
    %v35 = vld [vmem:[%s0 + $0x8] sm:$0xff]
    %s36 = smul.u32 0, 64
    %v37 = vlaneseq
    %v38 = vand.u32 %v37, 127
    %v39 = vstv %s36
    %v40 = vadd.s32 %v39, %v38
    %41 = vset.pattern.permute.xlu0 0
    %42 = vperm.xlu0 %41, %v34
    %v43 = vpop.permute.xlu0 %42
    %44 = vset.pattern.permute.xlu0 0
    %45 = vperm.xlu0 %44, %v35
    %v46 = vpop.permute.xlu0 %45
    %vm47 = vcmp.eq.s32.totalorder %v40, %v43
    %vm48 = vcmp.eq.s32.totalorder %v40, %v46
    %v49 = vsel %vm47, 1, 0
    %v50 = vsel %vm48, 1, 0
    %v51 = vcvt.s32.f32 %v49
    %v52 = vcvt.s32.f32 %v50
    %v53 = vld [vmem:[#allocation2] sm:$0xff]
    %v54 = vld [vmem:[#allocation2 + $0x8] sm:$0xff]
    %v55 = vld [vmem:[#allocation3] sm:$0xff]
    %v56 = vld [vmem:[#allocation3 + $0x8] sm:$0xff]
    %v57 = vld [vmem:[#allocation3 + $0x10] sm:$0xff]
    %v58 = vld [vmem:[#allocation3 + $0x18] sm:$0xff]
    %v59 = vld [vmem:[#allocation3 + $0x20] sm:$0xff]
    %v60 = vld [vmem:[#allocation3 + $0x28] sm:$0xff]
    %v61 = vld [vmem:[#allocation3 + $0x30] sm:$0xff]
    %v62 = vld [vmem:[#allocation3 + $0x38] sm:$0xff]
    %vm63 = vcmask 523264
    %v65 = vsel %vm63, %v51, 0
    %v68 = vsel %vm63, %v52, 0
    %70 = vmatpush.msra.mxu0 0.0
    %71 = vmatpush.msra.mxu0 0.0
    %72 = vmatpush.msra.mxu0 0.0
    %73 = vmatpush.msra.mxu0 0.0
    %74 = vmatpush.msra.mxu0 0.0
    %75 = vmatpush.msra.mxu0 0.0
    %76 = vmatpush.msra.mxu0 0.0
    %77 = vmatpush.msra.mxu0 0.0
    %78 = vmatpush.msra.mxu0 %v62
    %79 = vmatpush.msra.mxu0 %v61
    %80 = vmatpush.msra.mxu0 %v60
    %81 = vmatpush.msra.mxu0 %v59
    %82 = vmatpush.msra.mxu0 %v58
    %83 = vmatpush.msra.mxu0 %v57
    %84 = vmatpush.msra.mxu0 %v56
    %85 = vmatpush.msra.mxu0 %v55
    %86 = vmatmul.f32.gmra.mxu0 %v65
    %v87 = vpop.f32.mrf.mxu0
    %v88 = vadd.f32 0.0, %v87
    %89 = vmatmul.f32.gmra.mxu0 %v68
    %v90 = vpop.f32.mrf.mxu0
    %v91 = vadd.f32 0.0, %v90
    %92 = vdwg.mxu0
    %v93 = vadd.f32 %v53, %v88
    %v94 = vadd.f32 %v54, %v91
    %95 = vst [vmem:[#allocation2] sm:$0xff] %v93
    %96 = vst [vmem:[#allocation2 + $0x8] sm:$0xff] %v94
    // Predicated region
    $region18: #{embedding_lookup.1} parent=1 // pred_check
      %p97 = pneg %p28
    $region19: #{embedding_lookup.1} parent=1 // pred_check_branch
      %99 = sbr.rel (%p97) target = $region21
    $region20: #{embedding_lookup.1} parent=1 // pred_region
      %v100 = vld [vmem:[#allocation2] sm:$0xff]
      %v101 = vld [vmem:[#allocation2 + $0x8] sm:$0xff]
      %102 = vst [vmem:[#allocation6] sm:$0xff] %v100
      %103 = vst [vmem:[#allocation6 + $0x8] sm:$0xff] %v101
    $region21: #{embedding_lookup.1} parent=1 // pred_fallthru
      _
    // Predicated region
    $region22: #{embedding_lookup.1} parent=1 // pred_check
      _
    $region23: #{embedding_lookup.1} parent=1 // pred_check_branch
      %105 = sbr.rel (0) target = $region25
    $region24: #{embedding_lookup.1} parent=1 // pred_region
      %107 = vsyncadd [#allocation5], 0
      %s108 = sshll.u32 [#allocation6], 4
      %s109 = int_to_ptr.vmem [resolvable:$true] %s108
      %s110 = sshll.u32 %s2, 4
      %s111 = int_to_ptr.hbm [resolvable:$true] %s110
      %116 = dma.vmem_to_hbm [thread:$0]  %s109, 256, %s111, [#allocation5], 128, 128, 8
    $region25: #{embedding_lookup.1} parent=1 // pred_fallthru
      _
    // Predicated region
    $region26: #{embedding_lookup.1} parent=1 // pred_check
      _
    $region27: #{embedding_lookup.1} parent=1 // pred_check_branch
      %118 = sbr.rel (0) target = $region29
    $region28: #{embedding_lookup.1} parent=1 // pred_region
      %120 = dma.done [#allocation5], 256
    $region29: #{embedding_lookup.1} parent=1 // pred_fallthru
      _
    %121 = vsyncpa [#allocation4], 1
    %122 = vsyncpa [#allocation5], 1

</llo_original>
